<compile_context>
chip_gen: v5e
topology: v5e:2x2
jax: 0.10.0
libtpu: 0.0.40
codegen_flags: <defaults>
</compile_context>

<pallas_src>
import functools
import math

import jax
import jax.numpy as jnp
from jax.experimental import pallas as pl
from jax.experimental.pallas import tpu as pltpu


def _round_up(x, m):
    return (x + m - 1) // m * m


def _cdiv(a, b):
    return (a + b - 1) // b


def _vmem_capacity_bytes():
    try:
        return int(pltpu.get_tpu_info().vmem_capacity_bytes)
    except Exception:
        return 64 << 20  # conservative: v7x per-TensorCore VMEM


def _attention_kernel(x_ref, w_ref, o_ref, *, seq_len):
    """One (TB, TS, D) tile of x per step; softmax epilogue on the last S tile.

    x_ref: (TB, TS, D)   streamed input tile (native dtype, possibly ragged tail)
    w_ref: (1, D)        Linear(D, 1).weight, resident in VMEM
    o_ref: (TB, S_pad)   f32 output block, resident across the S grid axis
    """
    s = pl.program_id(1)
    ts = x_ref.shape[1]

    # Linear(D, 1): VPU multiply in the input dtype + f32 lane reduce over D
    # (no degenerate N=1 MXU matmul).
    x = x_ref[...]                                              # (TB, TS, D)
    w = w_ref[...].astype(x.dtype)                              # (1, D)
    scores = jnp.sum(x * w[None], axis=-1, dtype=jnp.float32)   # (TB, TS)

    start = pl.multiple_of(s * ts, 128)
    o_ref[:, pl.ds(start, ts)] = scores

    # Epilogue: every S tile of this B block has been scored -> softmax in place.
    @pl.when(s == pl.num_programs(1) - 1)
    def _():
        sc = o_ref[...]                                         # (TB, S_pad)
        col = jax.lax.broadcasted_iota(jnp.int32, sc.shape, 1)
        sc = jnp.where(col < seq_len, sc, -jnp.inf)             # mask S padding/garbage
        m = jnp.max(sc, axis=-1, keepdims=True)                 # (TB, 1)
        e = jnp.exp(sc - m)                                     # (TB, S_pad)
        denom = jnp.sum(e, axis=-1, keepdims=True)              # (TB, 1)
        o_ref[...] = e / denom    # exact divide: rows sum to 1 (lane-dense store)


def _choose_tiles(B, S, D, itemsize, vmem_budget):
    """Pick (TB, TS): TS multiple of 128, TB sublane multiple of 8 (or == B)."""
    # S tile: multiple of 128; keep ragged-tail compute overshoot modest.
    ts = min(512, _round_up(S, 128))
    while ts > 128 and _cdiv(S, ts) * ts > int(S * 1.25):
        ts -= 128

    def footprint(tb_, ts_):
        s_pad_ = _cdiv(S, ts_) * ts_
        # double-buffered x tile + (conservatively double-buffered) output block
        return 2 * tb_ * ts_ * D * itemsize + 2 * tb_ * s_pad_ * 4

    # B tile: grow in multiples of 8 while it fits the VMEM budget.
    if B <= 8:
        tb = B
    else:
        tb = 8
        while (tb < 64 and 2 * tb <= _round_up(B, 8)
               and footprint(2 * tb, ts) <= vmem_budget):
            tb *= 2

    # Large-D safety: shrink the S tile before overflowing the budget.
    while ts > 128 and footprint(tb, ts) > vmem_budget:
        ts -= 128
    # TODO(synk): extreme D (f32 D >~ 24K) would need a D-tiled accumulation
    # grid axis; not implemented.

    # v7x megacore: make sure the "parallel" B axis spans >= 2 blocks.
    while _cdiv(B, tb) < 2 and tb > 8:
        tb //= 2
    return tb, ts


def trainable_attention(token_embeddings, weight, bias=None):
    """token_embeddings: (B, S, D); weight: (1, D); bias: (1,) or None.

    Returns softmax((token_embeddings @ weight.T + bias).squeeze(-1), axis=-1),
    shape (B, S), f32.  The bias is accepted for nn.Linear parity but unused in
    the kernel: a uniform shift of the scores cancels inside softmax.
    """
    del bias  # mathematical no-op under softmax
    B, S, D = token_embeddings.shape
    assert weight.shape == (1, D)

    itemsize = token_embeddings.dtype.itemsize
    vmem_cap = _vmem_capacity_bytes()
    tb, ts = _choose_tiles(B, S, D, itemsize, int(vmem_cap * 0.6))
    s_pad = _cdiv(S, ts) * ts
    grid = (_cdiv(B, tb), _cdiv(S, ts))

    vmem_needed = (2 * tb * ts * D * itemsize     # x, double-buffered
                   + 2 * tb * s_pad * 4           # resident output block
                   + 2 * D * 4                    # weight
                   + (1 << 20))                   # headroom
    vmem_limit = int(min(max(vmem_needed, 32 << 20), int(vmem_cap * 0.75)))

    kernel = functools.partial(_attention_kernel, seq_len=S)

    out = pl.pallas_call(
        kernel,
        out_shape=jax.ShapeDtypeStruct((B, s_pad), jnp.float32),
        grid_spec=pltpu.PrefetchScalarGridSpec(
            num_scalar_prefetch=0,
            grid=grid,
            in_specs=[
                pl.BlockSpec((tb, ts, D), lambda b, s: (b, s, 0)),  # x: streamed, unpadded
                pl.BlockSpec((1, D), lambda b, s: (0, 0)),          # w: resident
            ],
            out_specs=pl.BlockSpec((tb, s_pad), lambda b, s: (b, 0)),  # resident over S
        ),
        compiler_params=pltpu.CompilerParams(
            dimension_semantics=("parallel", "arbitrary"),
            vmem_limit_bytes=vmem_limit,
        ),
        cost_estimate=pl.CostEstimate(
            flops=2 * B * S * D + 5 * B * s_pad,
            transcendentals=B * s_pad,
            bytes_accessed=B * S * D * itemsize + B * s_pad * 4 + D * itemsize,
        ),
    )(token_embeddings, weight)

    return out[:, :S] if s_pad != S else out


if __name__ == "__main__":
    # Small shapes implied by the module: (batch, seq, embedding_dim).
    B, S, D = 2, 8, 32

    key = jax.random.PRNGKey(0)
    kx, kw, kb = jax.random.split(key, 3)

    token_embeddings = jax.random.normal(kx, (B, S, D), dtype=jnp.float32)

    # nn.Linear(D, 1)-style init: uniform(-1/sqrt(D), 1/sqrt(D)).
    bound = 1.0 / math.sqrt(D)
    weight = jax.random.uniform(kw, (1, D), dtype=jnp.float32,
                                minval=-bound, maxval=bound)
    bias = jax.random.uniform(kb, (1,), dtype=jnp.float32,
                              minval=-bound, maxval=bound)

    out = jax.block_until_ready(trainable_attention(token_embeddings, weight, bias))

    # Reference includes the bias -- it cancels inside softmax, so the kernel
    # (which drops it) must still match.
    ref_scores = jnp.einsum("bsd,od->bs", token_embeddings, weight,
                            precision=jax.lax.Precision.HIGHEST) + bias[0]
    ref = jax.nn.softmax(ref_scores, axis=-1)
    assert out.shape == (B, S)
    assert jnp.allclose(out, ref, atol=1e-4, rtol=1e-4)
    assert jnp.allclose(jnp.sum(out, axis=-1), jnp.ones((B,)), atol=1e-4)

    # Larger shape: ragged S tail (600 % 128 != 0), multiple S tiles, >= 2 B
    # blocks (megacore split), epilogue masking of the padded columns.
    B2, S2, D2 = 16, 600, 128
    k2x, k2w = jax.random.split(jax.random.PRNGKey(1))
    x2 = jax.random.normal(k2x, (B2, S2, D2), dtype=jnp.float32)
    w2 = jax.random.normal(k2w, (1, D2), dtype=jnp.float32) * 0.05
    out2 = jax.block_until_ready(trainable_attention(x2, w2))
    ref2 = jax.nn.softmax(
        jnp.einsum("bsd,od->bs", x2, w2, precision=jax.lax.Precision.HIGHEST),
        axis=-1)
    assert out2.shape == (B2, S2)
    assert jnp.allclose(out2, ref2, atol=1e-4, rtol=1e-4)
    assert jnp.allclose(jnp.sum(out2, axis=-1), jnp.ones((B2,)), atol=1e-4)

    print("KERNEL_OK")
</pallas_src>

<mosaic_0001>
module attributes {stable_mosaic.version = 11 : i64} {
  func.func @_attention_kernel(%arg0: i32, %arg1: i32, %arg2: memref<2x128x32xf32, #tpu.memory_space<vmem>>, %arg3: memref<1x32xf32, #tpu.memory_space<vmem>>, %arg4: memref<2x128xf32, #tpu.memory_space<vmem>>) attributes {dimension_semantics = [#tpu.dimension_semantics<parallel>, #tpu.dimension_semantics<arbitrary>], iteration_bounds = array<i64: 1, 1>, scalar_prefetch = 0 : i64, scratch_operands = 0 : i64, tpu.core_type = #tpu.core_type<tc>, window_params = [{transform_indices = @transform_0, window_bounds = array<i64: 2, 128, 32>}, {pipeline_mode = #tpu.pipeline_mode<synchronous>, transform_indices = @transform_1, window_bounds = array<i64: 1, 32>}, {transform_indices = @transform_2, window_bounds = array<i64: 2, 128>}]} {
    %c0 = arith.constant 0 : index
    %c0_0 = arith.constant 0 : index
    %c0_1 = arith.constant 0 : index
    %0 = vector.load %arg2[%c0, %c0_0, %c0_1] : memref<2x128x32xf32, #tpu.memory_space<vmem>>, vector<2x128x32xf32>
    %c0_2 = arith.constant 0 : index
    %c0_3 = arith.constant 0 : index
    %1 = vector.load %arg3[%c0_2, %c0_3] : memref<1x32xf32, #tpu.memory_space<vmem>>, vector<1x32xf32>
    %2 = vector.shape_cast %1 : vector<1x32xf32> to vector<1x1x32xf32>
    %3 = vector.broadcast %2 : vector<1x1x32xf32> to vector<2x128x32xf32>
    %4 = arith.mulf %0, %3 : vector<2x128x32xf32>
    %cst = arith.constant dense<0.000000e+00> : vector<2x128xf32>
    %5 = vector.multi_reduction <add>, %4, %cst [2] : vector<2x128x32xf32> to vector<2x128xf32>
    %c128_i32 = arith.constant 128 : i32
    %6 = arith.muli %arg1, %c128_i32 : i32
    %7 = tpu.assume_multiple %6, 128 : i32
    %c0_4 = arith.constant 0 : index
    %8 = arith.index_cast %7 : i32 to index
    %9 = vector.load %arg4[%c0_4, %8] : memref<2x128xf32, #tpu.memory_space<vmem>>, vector<2x128xf32>
    tpu.vector_store %arg4[%c0_4, %8], %5 {strides = array<i32>} : memref<2x128xf32, #tpu.memory_space<vmem>>, vector<2x128xf32>,
    %c0_i32 = arith.constant 0 : i32
    %10 = arith.cmpi eq, %arg1, %c0_i32 : i32
    %11 = arith.extui %10 : i1 to i32
    %c0_i32_5 = arith.constant 0 : i32
    %12 = arith.cmpi ne, %11, %c0_i32_5 : i32
    scf.if %12 {
      %c0_6 = arith.constant 0 : index
      %c0_7 = arith.constant 0 : index
      %13 = vector.load %arg4[%c0_6, %c0_7] : memref<2x128xf32, #tpu.memory_space<vmem>>, vector<2x128xf32>
      %14 = tpu.iota {dimensions = array<i32: 1>} : vector<2x128xi32>
      %c8_i32 = arith.constant 8 : i32
      %15 = vector.broadcast %c8_i32 : i32 to vector<2x128xi32>
      %16 = arith.cmpi slt, %14, %15 : vector<2x128xi32>
      %cst_8 = arith.constant 0xFF800000 : f32
      %17 = vector.broadcast %cst_8 : f32 to vector<2x128xf32>
      %18 = arith.select %16, %13, %17 : vector<2x128xi1>, vector<2x128xf32>
      %cst_9 = arith.constant dense<0xFF800000> : vector<2xf32>
      %19 = vector.multi_reduction <maximumf>, %18, %cst_9 [1] : vector<2x128xf32> to vector<2xf32>
      %20 = vector.shape_cast %19 : vector<2xf32> to vector<2x1xf32>
      %21 = vector.broadcast %20 : vector<2x1xf32> to vector<2x128xf32>
      %22 = arith.subf %18, %21 : vector<2x128xf32>
      %23 = math.exp %22 : vector<2x128xf32>
      %cst_10 = arith.constant dense<0.000000e+00> : vector<2xf32>
      %24 = vector.multi_reduction <add>, %23, %cst_10 [1] : vector<2x128xf32> to vector<2xf32>
      %25 = vector.shape_cast %24 : vector<2xf32> to vector<2x1xf32>
      %26 = vector.broadcast %25 : vector<2x1xf32> to vector<2x128xf32>
      %27 = arith.divf %23, %26 : vector<2x128xf32>
      %c0_11 = arith.constant 0 : index
      %c0_12 = arith.constant 0 : index
      %28 = vector.load %arg4[%c0_11, %c0_12] : memref<2x128xf32, #tpu.memory_space<vmem>>, vector<2x128xf32>
      tpu.vector_store %arg4[%c0_11, %c0_12], %27 {strides = array<i32>} : memref<2x128xf32, #tpu.memory_space<vmem>>, vector<2x128xf32>,
    } else {
    }
    return
  }
  func.func @transform_0(%arg0: i32, %arg1: i32) -> (i32, i32, i32) {
    %c0_i32 = arith.constant 0 : i32
    %c0_i32_0 = arith.constant 0 : i32
    return %arg0, %arg1, %c0_i32 : i32, i32, i32
  }
  func.func @transform_1(%arg0: i32, %arg1: i32) -> (i32, i32) {
    %c0_i32 = arith.constant 0 : i32
    %c0_i32_0 = arith.constant 0 : i32
    %c0_i32_1 = arith.constant 0 : i32
    return %c0_i32, %c0_i32_0 : i32, i32
  }
  func.func @transform_2(%arg0: i32, %arg1: i32) -> (i32, i32) {
    %c0_i32 = arith.constant 0 : i32
    %c0_i32_0 = arith.constant 0 : i32
    return %arg0, %c0_i32 : i32, i32
  }
}

</mosaic_0001>

<llo_original>
// kernel: tpu_custom_call.1
$region0: #{tpu_custom_call.1}
  #allocation0 [shape = 'u32[]', space=smem, size = 0x4, offset = 0x4, fixed_abs, tag = 'smem constant byte address 0x4 - core index']
  #allocation1 [shape = 'u32[72,128]{1,0:T(1,128)}', space=vmem, size = 0x9000, scoped, tag = 'internal scratch']
  #allocation8 [shape = 's32[]', space=sflag, size = 0x4, offset = 0, fixed_abs, tag = 'sflag constant byte address 0x0 - dummy sync flag']
  %s0 = inlined_call_operand.hbm [shape: f32[2,8,32], index: 0, kind: input, shape index: {}]
  %s1 = inlined_call_operand.hbm [shape: f32[1,32], index: 1, kind: input, shape index: {}]
  %s2 = inlined_call_operand.hbm [shape: f32[2,128], index: 2, kind: output, shape index: {}]
  %s3 = sld [smem:[#allocation0]]
  $region30: #{tpu_custom_call.1} parent=0
    _
  %s5 = ssub.s32 1, %s3
  %s6 = scalar_select 0, %s5, %s3
  $region1: #{tpu_custom_call.1} parent=0
    #allocation2 [shape = 'u8[131072]{0}', space=vmem, size = 0x20000, scoped, tag = 'input window, operand 0, single buffered']
    #allocation3 [shape = 's32[1]{0}', space=sflag, size = 0x4, scoped, tag = 'scoped memory for tpu_custom_call.1']
    #allocation4 [shape = 's32[1]{0}', space=sflag, size = 0x4, scoped, tag = 'scoped memory for tpu_custom_call.1']
    #allocation5 [shape = 'u8[512]{0}', space=vmem, size = 0x400, scoped, tag = 'input window, operand 1, single buffered']
    #allocation6 [shape = 's32[1]{0}', space=sflag, size = 0x4, scoped, tag = 'scoped memory for tpu_custom_call.1']
    #allocation7 [shape = 'u8[1024]{0}', space=vmem, size = 0x400, scoped, tag = 'output window, operand 0, single buffered']
    %7 = vsyncpa [#allocation3], 0
    %8 = vsyncpa [#allocation6], 0
    %9 = vsyncpa [#allocation4], 0
    // Predicated region
    $region2: #{tpu_custom_call.1} parent=1 // pred_check
      _
    $region3: #{tpu_custom_call.1} parent=1 // pred_check_branch
      %11 = sbr.rel (0) target = $region5
    $region4: #{tpu_custom_call.1} parent=1 // pred_region
      #allocation9 [shape = 'u32[6]{0}', space=smem, size = 0x18, scoped, tag = 'DMA stride descriptor']
      %13 = vsyncadd [#allocation3], 3840
      %s15 = sshll.u32 1, 14
      %s16 = sxor.u32 4294967295, %s15
      %s18 = sld [smem:[#allocation0]]
      %s19 = sadd.s32 2, %s18
      %s21 = sshll.u32 7, 26
      %s22 = sxor.u32 4294967295, %s21
      %s23 = sand.u32 0, %s22
      %s24 = sshll.u32 %s19, 26
      %s25 = sor.u32 %s23, %s24
      %s26 = sshll.u32 %s0, 4
      %s27 = int_to_ptr.hbm [resolvable:$true] %s26
      %s28 = sshll.u32 [#allocation2], 4
      %s29 = int_to_ptr.vmem [resolvable:$true] %s28
      %35 = sst [smem:[#allocation9]] 128
      %s36 = scalar_lea.smem [#allocation9], 1
      %37 = sst [smem:[%s36]] 2048
      %s38 = scalar_lea.smem [#allocation9], 2
      %39 = sst [smem:[%s38]] 1
      %s40 = scalar_lea.smem [#allocation9], 3
      %41 = sst [smem:[%s40]] 128
      %s42 = scalar_lea.smem [#allocation9], 4
      %43 = sst [smem:[%s42]] 128
      %s44 = scalar_lea.smem [#allocation9], 5
      %45 = sst [smem:[%s44]] 8
      %47 = dma.general %s27, 256, %s29, [#allocation3], [#allocation8], [#allocation9], %s25, 0
    $region5: #{tpu_custom_call.1} parent=1 // pred_fallthru
      _
    // Predicated region
    $region6: #{tpu_custom_call.1} parent=1 // pred_check
      _
    $region7: #{tpu_custom_call.1} parent=1 // pred_check_branch
      %49 = sbr.rel (0) target = $region9
    $region8: #{tpu_custom_call.1} parent=1 // pred_region
      %51 = vsyncadd [#allocation6], 0
      %s53 = sshll.u32 %s1, 4
      %s54 = int_to_ptr.hbm [resolvable:$true] %s53
      %s55 = sshll.u32 [#allocation5], 4
      %s56 = int_to_ptr.vmem [resolvable:$true] %s55
      %58 = dma.hbm_to_vmem [thread:$0]  %s54, 16, %s56, [#allocation6]
    $region9: #{tpu_custom_call.1} parent=1 // pred_fallthru
      _
    // Predicated region
    $region10: #{tpu_custom_call.1} parent=1 // pred_check
      _
    $region11: #{tpu_custom_call.1} parent=1 // pred_check_branch
      %60 = sbr.rel (0) target = $region13
    $region12: #{tpu_custom_call.1} parent=1 // pred_region
      %62 = dma.done [#allocation3], 4096
    $region13: #{tpu_custom_call.1} parent=1 // pred_fallthru
      _
    // Predicated region
    $region14: #{tpu_custom_call.1} parent=1 // pred_check
      _
    $region15: #{tpu_custom_call.1} parent=1 // pred_check_branch
      %64 = sbr.rel (0) target = $region17
    $region16: #{tpu_custom_call.1} parent=1 // pred_region
      %66 = dma.done [#allocation6], 16
    $region17: #{tpu_custom_call.1} parent=1 // pred_fallthru
      _
    %v67 = vld [vmem:[#allocation2] sm:$0xff]
    %v68 = vld [vmem:[#allocation2 + $0x8] sm:$0xff]
    %v69 = vld [vmem:[#allocation2 + $0x10] sm:$0xff]
    %v70 = vld [vmem:[#allocation2 + $0x18] sm:$0xff]
    %v71 = vld [vmem:[#allocation2 + $0x20] sm:$0xff]
    %v72 = vld [vmem:[#allocation2 + $0x28] sm:$0xff]
    %v73 = vld [vmem:[#allocation2 + $0x30] sm:$0xff]
    %v74 = vld [vmem:[#allocation2 + $0x38] sm:$0xff]
    %v75 = vld [vmem:[#allocation2 + $0x40] sm:$0xff]
    %v76 = vld [vmem:[#allocation2 + $0x48] sm:$0xff]
    %v77 = vld [vmem:[#allocation2 + $0x50] sm:$0xff]
    %v78 = vld [vmem:[#allocation2 + $0x58] sm:$0xff]
    %v79 = vld [vmem:[#allocation2 + $0x60] sm:$0xff]
    %v80 = vld [vmem:[#allocation2 + $0x68] sm:$0xff]
    %v81 = vld [vmem:[#allocation2 + $0x70] sm:$0xff]
    %v82 = vld [vmem:[#allocation2 + $0x78] sm:$0xff]
    %v83 = vld [vmem:[#allocation2 + $0x80] sm:$0xff]
    %v84 = vld [vmem:[#allocation2 + $0x88] sm:$0xff]
    %v85 = vld [vmem:[#allocation2 + $0x90] sm:$0xff]
    %v86 = vld [vmem:[#allocation2 + $0x98] sm:$0xff]
    %v87 = vld [vmem:[#allocation2 + $0xa0] sm:$0xff]
    %v88 = vld [vmem:[#allocation2 + $0xa8] sm:$0xff]
    %v89 = vld [vmem:[#allocation2 + $0xb0] sm:$0xff]
    %v90 = vld [vmem:[#allocation2 + $0xb8] sm:$0xff]
    %v91 = vld [vmem:[#allocation2 + $0xc0] sm:$0xff]
    %v92 = vld [vmem:[#allocation2 + $0xc8] sm:$0xff]
    %v93 = vld [vmem:[#allocation2 + $0xd0] sm:$0xff]
    %v94 = vld [vmem:[#allocation2 + $0xd8] sm:$0xff]
    %v95 = vld [vmem:[#allocation2 + $0xe0] sm:$0xff]
    %v96 = vld [vmem:[#allocation2 + $0xe8] sm:$0xff]
    %v97 = vld [vmem:[#allocation2 + $0xf0] sm:$0xff]
    %v98 = vld [vmem:[#allocation2 + $0xf8] sm:$0xff]
    %v99 = vld [vmem:[#allocation5] sm:$0x1]
    %v101 = vperm.slane %v99, 0
    %v103 = vmul.f32 %v67, %v101
    %v104 = vmul.f32 %v68, %v101
    %v105 = vmul.f32 %v69, %v101
    %v106 = vmul.f32 %v70, %v101
    %v107 = vmul.f32 %v71, %v101
    %v108 = vmul.f32 %v72, %v101
    %v109 = vmul.f32 %v73, %v101
    %v110 = vmul.f32 %v74, %v101
    %v111 = vmul.f32 %v75, %v101
    %v112 = vmul.f32 %v76, %v101
    %v113 = vmul.f32 %v77, %v101
    %v114 = vmul.f32 %v78, %v101
    %v115 = vmul.f32 %v79, %v101
    %v116 = vmul.f32 %v80, %v101
    %v117 = vmul.f32 %v81, %v101
    %v118 = vmul.f32 %v82, %v101
    %v119 = vmul.f32 %v83, %v101
    %v120 = vmul.f32 %v84, %v101
    %v121 = vmul.f32 %v85, %v101
    %v122 = vmul.f32 %v86, %v101
    %v123 = vmul.f32 %v87, %v101
    %v124 = vmul.f32 %v88, %v101
    %v125 = vmul.f32 %v89, %v101
    %v126 = vmul.f32 %v90, %v101
    %v127 = vmul.f32 %v91, %v101
    %v128 = vmul.f32 %v92, %v101
    %v129 = vmul.f32 %v93, %v101
    %v130 = vmul.f32 %v94, %v101
    %v131 = vmul.f32 %v95, %v101
    %v132 = vmul.f32 %v96, %v101
    %v133 = vmul.f32 %v97, %v101
    %v134 = vmul.f32 %v98, %v101
    %vm135 = vcmask 261120
    %v136 = vsel %vm135, %v103, 0.0
    %137 = vadd.xlane.f32.xlu0 %v136
    %v138 = vpop.xlane.xlu0 %137
    %v139 = vsel %vm135, %v104, 0.0
    %140 = vadd.xlane.f32.xlu0 %v139
    %v141 = vpop.xlane.xlu0 %140
    %v142 = vsel %vm135, %v105, 0.0
    %143 = vadd.xlane.f32.xlu0 %v142
    %v144 = vpop.xlane.xlu0 %143
    %v145 = vsel %vm135, %v106, 0.0
    %146 = vadd.xlane.f32.xlu0 %v145
    %v147 = vpop.xlane.xlu0 %146
    %v148 = vsel %vm135, %v107, 0.0
    %149 = vadd.xlane.f32.xlu0 %v148
    %v150 = vpop.xlane.xlu0 %149
    %v151 = vsel %vm135, %v108, 0.0
    %152 = vadd.xlane.f32.xlu0 %v151
    %v153 = vpop.xlane.xlu0 %152
    %v154 = vsel %vm135, %v109, 0.0
    %155 = vadd.xlane.f32.xlu0 %v154
    %v156 = vpop.xlane.xlu0 %155
    %v157 = vsel %vm135, %v110, 0.0
    %158 = vadd.xlane.f32.xlu0 %v157
    %v159 = vpop.xlane.xlu0 %158
    %v160 = vsel %vm135, %v111, 0.0
    %161 = vadd.xlane.f32.xlu0 %v160
    %v162 = vpop.xlane.xlu0 %161
    %v163 = vsel %vm135, %v112, 0.0
    %164 = vadd.xlane.f32.xlu0 %v163
    %v165 = vpop.xlane.xlu0 %164
    %v166 = vsel %vm135, %v113, 0.0
    %167 = vadd.xlane.f32.xlu0 %v166
    %v168 = vpop.xlane.xlu0 %167
    %v169 = vsel %vm135, %v114, 0.0
    %170 = vadd.xlane.f32.xlu0 %v169
    %v171 = vpop.xlane.xlu0 %170
    %v172 = vsel %vm135, %v115, 0.0
    %173 = vadd.xlane.f32.xlu0 %v172
    %v174 = vpop.xlane.xlu0 %173
    %v175 = vsel %vm135, %v116, 0.0
    %176 = vadd.xlane.f32.xlu0 %v175
    %v177 = vpop.xlane.xlu0 %176
    %v178 = vsel %vm135, %v117, 0.0
    %179 = vadd.xlane.f32.xlu0 %v178
    %v180 = vpop.xlane.xlu0 %179
    %v181 = vsel %vm135, %v118, 0.0
    %182 = vadd.xlane.f32.xlu0 %v181
    %v183 = vpop.xlane.xlu0 %182
    %v184 = vsel %vm135, %v119, 0.0
    %185 = vadd.xlane.f32.xlu0 %v184
    %v186 = vpop.xlane.xlu0 %185
    %v187 = vsel %vm135, %v120, 0.0
    %188 = vadd.xlane.f32.xlu0 %v187
    %v189 = vpop.xlane.xlu0 %188
    %v190 = vsel %vm135, %v121, 0.0
    %191 = vadd.xlane.f32.xlu0 %v190
    %v192 = vpop.xlane.xlu0 %191
    %v193 = vsel %vm135, %v122, 0.0
    %194 = vadd.xlane.f32.xlu0 %v193
    %v195 = vpop.xlane.xlu0 %194
    %v196 = vsel %vm135, %v123, 0.0
    %197 = vadd.xlane.f32.xlu0 %v196
    %v198 = vpop.xlane.xlu0 %197
    %v199 = vsel %vm135, %v124, 0.0
    %200 = vadd.xlane.f32.xlu0 %v199
    %v201 = vpop.xlane.xlu0 %200
    %v202 = vsel %vm135, %v125, 0.0
    %203 = vadd.xlane.f32.xlu0 %v202
    %v204 = vpop.xlane.xlu0 %203
    %v205 = vsel %vm135, %v126, 0.0
    %206 = vadd.xlane.f32.xlu0 %v205
    %v207 = vpop.xlane.xlu0 %206
    %v208 = vsel %vm135, %v127, 0.0
    %209 = vadd.xlane.f32.xlu0 %v208
    %v210 = vpop.xlane.xlu0 %209
    %v211 = vsel %vm135, %v128, 0.0
    %212 = vadd.xlane.f32.xlu0 %v211
    %v213 = vpop.xlane.xlu0 %212
    %v214 = vsel %vm135, %v129, 0.0
    %215 = vadd.xlane.f32.xlu0 %v214
    %v216 = vpop.xlane.xlu0 %215
    %v217 = vsel %vm135, %v130, 0.0
    %218 = vadd.xlane.f32.xlu0 %v217
    %v219 = vpop.xlane.xlu0 %218
    %v220 = vsel %vm135, %v131, 0.0
    %221 = vadd.xlane.f32.xlu0 %v220
    %v222 = vpop.xlane.xlu0 %221
    %v223 = vsel %vm135, %v132, 0.0
    %224 = vadd.xlane.f32.xlu0 %v223
    %v225 = vpop.xlane.xlu0 %224
    %v226 = vsel %vm135, %v133, 0.0
    %227 = vadd.xlane.f32.xlu0 %v226
    %v228 = vpop.xlane.xlu0 %227
    %v229 = vsel %vm135, %v134, 0.0
    %230 = vadd.xlane.f32.xlu0 %v229
    %v231 = vpop.xlane.xlu0 %230
    %s232 = smul.u32 0, 128
    %v265 = vlaneseq
    %v266 = vand.u32 %v265, 127
    %v267 = vperm.slane %v138, %v266
    %v268 = vadd.s32 %v266, 4294967288
    %v269 = vperm.slane %v141, %v268
    %vm270 = vcmask 130112
    %v271 = vsel %vm270, %v269, %v267
    %v272 = vadd.s32 %v266, 4294967280
    %v273 = vperm.slane %v144, %v272
    %vm274 = vcmask 195712
    %v275 = vsel %vm274, %v273, %v271
    %v276 = vadd.s32 %v266, 4294967272
    %v277 = vperm.slane %v147, %v276
    %vm278 = vcmask 261312
    %v279 = vsel %vm278, %v277, %v275
    %v280 = vadd.s32 %v266, 4294967264
    %v281 = vperm.slane %v150, %v280
    %vm282 = vcmask 326912
    %v283 = vsel %vm282, %v281, %v279
    %v284 = vadd.s32 %v266, 4294967256
    %v285 = vperm.slane %v153, %v284
    %vm286 = vcmask 392512
    %v287 = vsel %vm286, %v285, %v283
    %v288 = vadd.s32 %v266, 4294967248
    %v289 = vperm.slane %v156, %v288
    %vm290 = vcmask 458112
    %v291 = vsel %vm290, %v289, %v287
    %v292 = vadd.s32 %v266, 4294967240
    %v293 = vperm.slane %v159, %v292
    %vm294 = vcmask 523712
    %v295 = vsel %vm294, %v293, %v291
    %v296 = vadd.s32 %v266, 4294967232
    %v297 = vperm.slane %v162, %v296
    %vm298 = vcmask 589312
    %v299 = vsel %vm298, %v297, %v295
    %v300 = vadd.s32 %v266, 4294967224
    %v301 = vperm.slane %v165, %v300
    %vm302 = vcmask 654912
    %v303 = vsel %vm302, %v301, %v299
    %v304 = vadd.s32 %v266, 4294967216
    %v305 = vperm.slane %v168, %v304
    %vm306 = vcmask 720512
    %v307 = vsel %vm306, %v305, %v303
    %v308 = vadd.s32 %v266, 4294967208
    %v309 = vperm.slane %v171, %v308
    %vm310 = vcmask 786112
    %v311 = vsel %vm310, %v309, %v307
    %v312 = vadd.s32 %v266, 4294967200
    %v313 = vperm.slane %v174, %v312
    %vm314 = vcmask 851712
    %v315 = vsel %vm314, %v313, %v311
    %v316 = vadd.s32 %v266, 4294967192
    %v317 = vperm.slane %v177, %v316
    %vm318 = vcmask 917312
    %v319 = vsel %vm318, %v317, %v315
    %v320 = vadd.s32 %v266, 4294967184
    %v321 = vperm.slane %v180, %v320
    %vm322 = vcmask 982912
    %v323 = vsel %vm322, %v321, %v319
    %v324 = vadd.s32 %v266, 4294967176
    %v325 = vperm.slane %v183, %v324
    %vm326 = vcmask 1048512
    %v327 = vsel %vm326, %v325, %v323
    %v328 = vperm.slane %v186, %v266
    %v329 = vperm.slane %v189, %v268
    %v330 = vsel %vm270, %v329, %v328
    %v331 = vperm.slane %v192, %v272
    %v332 = vsel %vm274, %v331, %v330
    %v333 = vperm.slane %v195, %v276
    %v334 = vsel %vm278, %v333, %v332
    %v335 = vperm.slane %v198, %v280
    %v336 = vsel %vm282, %v335, %v334
    %v337 = vperm.slane %v201, %v284
    %v338 = vsel %vm286, %v337, %v336
    %v339 = vperm.slane %v204, %v288
    %v340 = vsel %vm290, %v339, %v338
    %v341 = vperm.slane %v207, %v292
    %v342 = vsel %vm294, %v341, %v340
    %v343 = vperm.slane %v210, %v296
    %v344 = vsel %vm298, %v343, %v342
    %v345 = vperm.slane %v213, %v300
    %v346 = vsel %vm302, %v345, %v344
    %v347 = vperm.slane %v216, %v304
    %v348 = vsel %vm306, %v347, %v346
    %v349 = vperm.slane %v219, %v308
    %v350 = vsel %vm310, %v349, %v348
    %v351 = vperm.slane %v222, %v312
    %v352 = vsel %vm314, %v351, %v350
    %v353 = vperm.slane %v225, %v316
    %v354 = vsel %vm318, %v353, %v352
    %v355 = vperm.slane %v228, %v320
    %v356 = vsel %vm322, %v355, %v354
    %v357 = vperm.slane %v231, %v324
    %v358 = vsel %vm326, %v357, %v356
    %vm359 = vcmask 1041409
    %v360 = vsel %vm359, %v358, %v327
    %s362 = sshra.s32 %s232, 7
    %s363 = sand.u32 %s232, 127
    %s364 = scalar_lea.vmem [#allocation7], %s362
    %365 = vst [vmem:[%s364] sm:$0x3] %v360
    %p366 = scmp.eq.s32.totalorder 0, 0
    // Predicated region
    $region18: #{tpu_custom_call.1} parent=1 // pred_check
      %p367 = pneg %p366
    $region19: #{tpu_custom_call.1} parent=1 // pred_check_branch
      %369 = sbr.rel (%p367) target = $region21
    $region20: #{tpu_custom_call.1} parent=1 // pred_region
      %v370 = vld [vmem:[#allocation7] sm:$0x3]
      %vm371 = vcmp.lt.s32.totalorder %v266, 8
      %v372 = vsel %vm371, %v370, -inf
      %vm373 = vcmask 1041408
      %v374 = vsel %vm373, %v372, -inf
      %375 = vmax.xlane.f32.xlu0 %v374
      %v376 = vpop.xlane.xlu0 %375
      %v377 = vsub.f32 %v372, %v376
      %v378 = vmul.f32 %v377, 1.442695
      %v379 = vpow.pop %v378
      %v380 = vsel %vm373, %v379, 0.0
      %381 = vadd.xlane.f32.xlu0 %v380
      %v382 = vpop.xlane.xlu0 %381
      %v383 = vrcp.pop %v382
      %v384 = vmul.f32 %v382, %v383
      %v385 = vsub.f32 1.0, %v384
      %v386 = vmul.f32 %v383, %v385
      %v387 = vadd.f32 %v383, %v386
      %vm388 = vweird.f32 %v382
      %vm389 = vweird.f32 %v383
      %vm390 = vmor %vm388, %vm389
      %v391 = vsel %vm390, %v383, %v387
      %v392 = vand.u32 2147483647, %v382
      %vm393 = vcmp.eq.f32.partialorder %v392, 8.507059e+37
      %v394 = vand.u32 %v382, 2147483648
      %v395 = vor.u32 1.1754944e-38, %v394
      %v396 = vsel %vm393, %v395, %v391
      %v397 = vmul.f32 %v379, %v396
      %398 = vst [vmem:[#allocation7] sm:$0x3] %v397
    $region21: #{tpu_custom_call.1} parent=1 // pred_fallthru
      _
    // Predicated region
    $region22: #{tpu_custom_call.1} parent=1 // pred_check
      _
    $region23: #{tpu_custom_call.1} parent=1 // pred_check_branch
      %400 = sbr.rel (0) target = $region25
    $region24: #{tpu_custom_call.1} parent=1 // pred_region
      %402 = vsyncadd [#allocation4], 0
      %s404 = sshll.u32 [#allocation7], 4
      %s405 = int_to_ptr.vmem [resolvable:$true] %s404
      %s406 = sshll.u32 %s2, 4
      %s407 = int_to_ptr.hbm [resolvable:$true] %s406
      %409 = dma.vmem_to_hbm [thread:$0]  %s405, 32, %s407, [#allocation4]
    $region25: #{tpu_custom_call.1} parent=1 // pred_fallthru
      _
    // Predicated region
    $region26: #{tpu_custom_call.1} parent=1 // pred_check
      _
    $region27: #{tpu_custom_call.1} parent=1 // pred_check_branch
      %411 = sbr.rel (0) target = $region29
    $region28: #{tpu_custom_call.1} parent=1 // pred_region
      %413 = dma.done [#allocation4], 32
    $region29: #{tpu_custom_call.1} parent=1 // pred_fallthru
      _
    %414 = vsyncpa [#allocation3], 1
    %415 = vsyncpa [#allocation6], 1
    %416 = vsyncpa [#allocation4], 1

</llo_original>
